<compile_context>
chip_gen: v6e
topology: v6e:2x2x1
jax: 0.10.0
libtpu: 0.0.40
codegen_flags: <defaults>
</compile_context>

<pallas_src>
import functools

import jax
import jax.numpy as jnp
from jax.experimental import pallas as pl
from jax.experimental.pallas import tpu as pltpu

IN_FEATURES = 11
OUT_FEATURES = 3
OUT_PAD = 8      # output feature rows padded 3 -> 8 (one f32 sublane tile)
LANE = 128       # TPU lane width; batch tiles are multiples of this


def _round_up(n, m):
    return ((n + m - 1) // m) * m


def qnet_kernel(xT_ref, w1_ref, b1_ref, w2_ref, b2_ref, oT_ref):
    # xT: (11, TB) -- batch on the lane axis.
    # w1: (H, 11) PyTorch layout; b1: (H, 1).
    # w2: (8, H)  = PyTorch (3, H) zero-padded on rows; b2: (8, 1) zero-padded.
    xT = xT_ref[...]
    # linear1 on the MXU, f32 accumulate: (H, 11) @ (11, TB) -> (H, TB)
    h = jnp.dot(w1_ref[...], xT, preferred_element_type=jnp.float32) + b1_ref[...]
    h = jnp.maximum(h, 0.0)  # ReLU on the VPU
    # linear2: (8, H) @ (H, TB) -> (8, TB); lane-dense unmasked store
    out = jnp.dot(w2_ref[...], h, preferred_element_type=jnp.float32) + b2_ref[...]
    oT_ref[...] = out.astype(oT_ref.dtype)


def prepare_params(w1, b1, w2, b2):
    """One-time (outside the hot path): PyTorch-layout params -> kernel layout.

    w1 (H, 11) and w2 (3, H) keep their PyTorch orientation (no transposes);
    w2/b2 are zero-padded from 3 to 8 output rows (pad rows compute exact
    zeros and are sliced off in the wrapper); biases become column vectors.
    """
    H = w1.shape[0]
    w1_k = jnp.asarray(w1, jnp.float32)                              # (H, 11)
    b1_k = jnp.asarray(b1, jnp.float32).reshape(H, 1)                # (H, 1)
    w2_k = jnp.zeros((OUT_PAD, H), jnp.float32).at[:OUT_FEATURES].set(
        jnp.asarray(w2, jnp.float32))                                # (8, H)
    b2_k = jnp.zeros((OUT_PAD, 1), jnp.float32).at[:OUT_FEATURES, 0].set(
        jnp.asarray(b2, jnp.float32).reshape(OUT_FEATURES))          # (8, 1)
    return w1_k, b1_k, w2_k, b2_k


def _choose_block(batch, max_block_b):
    """Batch tile size (batch is the lane axis => multiple of 128)."""
    batch = max(int(batch), 1)
    if batch <= LANE:
        return LANE   # single (partially masked) block; nothing to balance
    # >= 2 balanced blocks with an even count: lets dimension_semantics=
    # ("parallel",) split the batch across v7x's two TensorCores; the extra
    # ~0.35us grid step on v5e/v6e (1 TC) is negligible.
    nblocks = pl.cdiv(batch, max_block_b)
    nblocks = max(2, 2 * pl.cdiv(nblocks, 2))
    return min(max_block_b, _round_up(pl.cdiv(batch, nblocks), LANE))


@functools.partial(jax.jit, static_argnames=("block_b",))
def _forward_impl(x, w1_k, b1_k, w2_k, b2_k, *, block_b):
    B = x.shape[0]
    hidden = w1_k.shape[0]
    xT = jnp.transpose(x)                                   # (11, B): batch -> lanes
    grid = (pl.cdiv(B, block_b),)
    outT = pl.pallas_call(
        qnet_kernel,
        out_shape=jax.ShapeDtypeStruct((OUT_PAD, B), jnp.float32),
        grid=grid,
        in_specs=[
            # x: tiled over the batch (lane) axis; partial last block is masked
            pl.BlockSpec((IN_FEATURES, block_b), lambda i: (0, i)),
            # weights / biases: same block every step -> stay resident in VMEM
            pl.BlockSpec((hidden, IN_FEATURES), lambda i: (0, 0)),
            pl.BlockSpec((hidden, 1), lambda i: (0, 0)),
            pl.BlockSpec((OUT_PAD, hidden), lambda i: (0, 0)),
            pl.BlockSpec((OUT_PAD, 1), lambda i: (0, 0)),
        ],
        out_specs=pl.BlockSpec((OUT_PAD, block_b), lambda i: (0, i)),
        compiler_params=pltpu.CompilerParams(
            dimension_semantics=("parallel",)),  # batch shards across TCs on v7x
    )(xT, w1_k, b1_k, w2_k, b2_k)
    return jnp.transpose(outT[:OUT_FEATURES, :])             # (B, 3)


def linear_qnet_forward(x, prepared_params, *, max_block_b=8192):
    """forward(x) == linear2(relu(linear1(x))) with PyTorch semantics."""
    w1_k, b1_k, w2_k, b2_k = prepared_params
    x = jnp.asarray(x, jnp.float32)
    tb = _choose_block(x.shape[0], max_block_b)
    return _forward_impl(x, w1_k, b1_k, w2_k, b2_k, block_b=tb)


def init_params(key, in_features=IN_FEATURES, hidden=32, out_features=OUT_FEATURES):
    # PyTorch nn.Linear default init: U(-1/sqrt(fan_in), 1/sqrt(fan_in)).
    k1, k2, k3, k4 = jax.random.split(key, 4)
    bound1 = 1.0 / jnp.sqrt(jnp.float32(in_features))
    bound2 = 1.0 / jnp.sqrt(jnp.float32(hidden))
    w1 = jax.random.uniform(k1, (hidden, in_features), jnp.float32, -bound1, bound1)
    b1 = jax.random.uniform(k2, (hidden,), jnp.float32, -bound1, bound1)
    w2 = jax.random.uniform(k3, (out_features, hidden), jnp.float32, -bound2, bound2)
    b2 = jax.random.uniform(k4, (out_features,), jnp.float32, -bound2, bound2)
    return w1, b1, w2, b2


def _reference(x, w1, b1, w2, b2):
    return jnp.maximum(x @ w1.T + b1, 0.0) @ w2.T + b2


if __name__ == "__main__":
    key = jax.random.PRNGKey(0)
    kx1, kx2, kp = jax.random.split(key, 3)

    HIDDEN = 32  # options.layers[0] == 32
    w1, b1, w2, b2 = init_params(kp, IN_FEATURES, HIDDEN, OUT_FEATURES)
    prepared = prepare_params(w1, b1, w2, b2)  # one-time layout prep

    # Small inference-style batch: one block, partially masked on read/write.
    x_small = jax.random.normal(kx1, (8, IN_FEATURES), jnp.float32)
    out_small = jax.block_until_ready(linear_qnet_forward(x_small, prepared))
    assert out_small.shape == (8, OUT_FEATURES)
    assert jnp.allclose(out_small, _reference(x_small, w1, b1, w2, b2),
                        atol=1e-5, rtol=1e-5)

    # Larger batch: two balanced blocks (640 + partial 390), exercises the grid,
    # resident-weight revisits, and the masked partial-block writeback.
    x_big = jax.random.normal(kx2, (1030, IN_FEATURES), jnp.float32)
    out_big = jax.block_until_ready(linear_qnet_forward(x_big, prepared))
    assert out_big.shape == (1030, OUT_FEATURES)
    assert jnp.allclose(out_big, _reference(x_big, w1, b1, w2, b2),
                        atol=1e-5, rtol=1e-5)

    print("KERNEL_OK")
</pallas_src>

<mosaic_0001>
module attributes {stable_mosaic.version = 11 : i64} {
  func.func @qnet_kernel(%arg0: i32, %arg1: memref<11x128xf32, #tpu.memory_space<vmem>>, %arg2: memref<32x11xf32, #tpu.memory_space<vmem>>, %arg3: memref<32x1xf32, #tpu.memory_space<vmem>>, %arg4: memref<8x32xf32, #tpu.memory_space<vmem>>, %arg5: memref<8x1xf32, #tpu.memory_space<vmem>>, %arg6: memref<8x128xf32, #tpu.memory_space<vmem>>) attributes {dimension_semantics = [#tpu.dimension_semantics<parallel>], iteration_bounds = array<i64: 1>, scalar_prefetch = 0 : i64, scratch_operands = 0 : i64, tpu.core_type = #tpu.core_type<tc>, window_params = [{transform_indices = @transform_0, window_bounds = array<i64: 11, 128>}, {pipeline_mode = #tpu.pipeline_mode<synchronous>, transform_indices = @transform_1, window_bounds = array<i64: 32, 11>}, {pipeline_mode = #tpu.pipeline_mode<synchronous>, transform_indices = @transform_2, window_bounds = array<i64: 32, 1>}, {pipeline_mode = #tpu.pipeline_mode<synchronous>, transform_indices = @transform_3, window_bounds = array<i64: 8, 32>}, {pipeline_mode = #tpu.pipeline_mode<synchronous>, transform_indices = @transform_4, window_bounds = array<i64: 8, 1>}, {transform_indices = @transform_5, window_bounds = array<i64: 8, 128>}]} {
    %c0 = arith.constant 0 : index
    %c0_0 = arith.constant 0 : index
    %0 = vector.load %arg1[%c0, %c0_0] : memref<11x128xf32, #tpu.memory_space<vmem>>, vector<11x128xf32>
    %c0_1 = arith.constant 0 : index
    %c0_2 = arith.constant 0 : index
    %1 = vector.load %arg2[%c0_1, %c0_2] : memref<32x11xf32, #tpu.memory_space<vmem>>, vector<32x11xf32>
    %cst = arith.constant dense<0.000000e+00> : vector<32x128xf32>
    %2 = tpu.matmul %1, %0, %cst {dimension_numbers = #tpu.dot_dimension_numbers<[1], [0], [0], [1], [0, 0, 1, 1], [], []>} : vector<32x11xf32>, vector<11x128xf32>, vector<32x128xf32> -> vector<32x128xf32>
    %c0_3 = arith.constant 0 : index
    %c0_4 = arith.constant 0 : index
    %3 = vector.load %arg3[%c0_3, %c0_4] : memref<32x1xf32, #tpu.memory_space<vmem>>, vector<32x1xf32>
    %4 = vector.broadcast %3 : vector<32x1xf32> to vector<32x128xf32>
    %5 = arith.addf %2, %4 : vector<32x128xf32>
    %cst_5 = arith.constant 0.000000e+00 : f32
    %6 = vector.broadcast %cst_5 : f32 to vector<32x128xf32>
    %7 = arith.maximumf %5, %6 : vector<32x128xf32>
    %c0_6 = arith.constant 0 : index
    %c0_7 = arith.constant 0 : index
    %8 = vector.load %arg4[%c0_6, %c0_7] : memref<8x32xf32, #tpu.memory_space<vmem>>, vector<8x32xf32>
    %cst_8 = arith.constant dense<0.000000e+00> : vector<8x128xf32>
    %9 = tpu.matmul %8, %7, %cst_8 {dimension_numbers = #tpu.dot_dimension_numbers<[1], [0], [0], [1], [0, 0, 1, 1], [], []>} : vector<8x32xf32>, vector<32x128xf32>, vector<8x128xf32> -> vector<8x128xf32>
    %c0_9 = arith.constant 0 : index
    %c0_10 = arith.constant 0 : index
    %10 = vector.load %arg5[%c0_9, %c0_10] : memref<8x1xf32, #tpu.memory_space<vmem>>, vector<8x1xf32>
    %11 = vector.broadcast %10 : vector<8x1xf32> to vector<8x128xf32>
    %12 = arith.addf %9, %11 : vector<8x128xf32>
    %c0_11 = arith.constant 0 : index
    %c0_12 = arith.constant 0 : index
    %13 = vector.load %arg6[%c0_11, %c0_12] : memref<8x128xf32, #tpu.memory_space<vmem>>, vector<8x128xf32>
    tpu.vector_store %arg6[%c0_11, %c0_12], %12 {strides = array<i32>} : memref<8x128xf32, #tpu.memory_space<vmem>>, vector<8x128xf32>,
    return
  }
  func.func @transform_0(%arg0: i32) -> (i32, i32) {
    %c0_i32 = arith.constant 0 : i32
    %c0_i32_0 = arith.constant 0 : i32
    return %c0_i32, %arg0 : i32, i32
  }
  func.func @transform_1(%arg0: i32) -> (i32, i32) {
    %c0_i32 = arith.constant 0 : i32
    %c0_i32_0 = arith.constant 0 : i32
    %c0_i32_1 = arith.constant 0 : i32
    return %c0_i32, %c0_i32_0 : i32, i32
  }
  func.func @transform_2(%arg0: i32) -> (i32, i32) {
    %c0_i32 = arith.constant 0 : i32
    %c0_i32_0 = arith.constant 0 : i32
    %c0_i32_1 = arith.constant 0 : i32
    return %c0_i32, %c0_i32_0 : i32, i32
  }
  func.func @transform_3(%arg0: i32) -> (i32, i32) {
    %c0_i32 = arith.constant 0 : i32
    %c0_i32_0 = arith.constant 0 : i32
    %c0_i32_1 = arith.constant 0 : i32
    return %c0_i32, %c0_i32_0 : i32, i32
  }
  func.func @transform_4(%arg0: i32) -> (i32, i32) {
    %c0_i32 = arith.constant 0 : i32
    %c0_i32_0 = arith.constant 0 : i32
    %c0_i32_1 = arith.constant 0 : i32
    return %c0_i32, %c0_i32_0 : i32, i32
  }
  func.func @transform_5(%arg0: i32) -> (i32, i32) {
    %c0_i32 = arith.constant 0 : i32
    %c0_i32_0 = arith.constant 0 : i32
    return %c0_i32, %arg0 : i32, i32
  }
}

</mosaic_0001>

<llo_original>
// kernel: _forward_impl.1
$region0: #{_forward_impl.1}
  #allocation0 [shape = 'u32[]', space=smem, size = 0x4, offset = 0x4, fixed_abs, tag = 'smem constant byte address 0x4 - core index']
  #allocation1 [shape = 'u32[144,128]{1,0:T(1,128)}', space=vmem, size = 0x12000, scoped, tag = 'internal scratch']
  %s0 = inlined_call_operand.vmem [shape: f32[11,8], index: 0, kind: input, shape index: {}]
  %s1 = inlined_call_operand.vmem [shape: f32[32,11], index: 1, kind: input, shape index: {}]
  %s2 = inlined_call_operand.vmem [shape: f32[32,1], index: 2, kind: input, shape index: {}]
  %s3 = inlined_call_operand.vmem [shape: f32[8,32], index: 3, kind: input, shape index: {}]
  %s4 = inlined_call_operand.vmem [shape: f32[8,1], index: 4, kind: input, shape index: {}]
  %s5 = inlined_call_operand.vmem [shape: f32[8,8], index: 5, kind: output, shape index: {}]
  %s6 = sld [smem:[#allocation0]]
  $region30: #{_forward_impl.1} parent=0
    _
  %s8 = ssub.s32 1, %s6
  %s9 = scalar_select 0, %s8, %s6
  // Predicated region
  $region2: #{_forward_impl.1} parent=0 // pred_check
    _
  $region3: #{_forward_impl.1} parent=0 // pred_check_branch
    %11 = sbr.rel (0) target = $region5
  $region4: #{_forward_impl.1} parent=0 // pred_region
    _
  $region5: #{_forward_impl.1} parent=0 // pred_fallthru
    _
  // Predicated region
  $region6: #{_forward_impl.1} parent=0 // pred_check
    _
  $region7: #{_forward_impl.1} parent=0 // pred_check_branch
    %13 = sbr.rel (0) target = $region9
  $region8: #{_forward_impl.1} parent=0 // pred_region
    _
  $region9: #{_forward_impl.1} parent=0 // pred_fallthru
    _
  // Predicated region
  $region10: #{_forward_impl.1} parent=0 // pred_check
    _
  $region11: #{_forward_impl.1} parent=0 // pred_check_branch
    %15 = sbr.rel (0) target = $region13
  $region12: #{_forward_impl.1} parent=0 // pred_region
    _
  $region13: #{_forward_impl.1} parent=0 // pred_fallthru
    _
  // Predicated region
  $region14: #{_forward_impl.1} parent=0 // pred_check
    _
  $region15: #{_forward_impl.1} parent=0 // pred_check_branch
    %17 = sbr.rel (0) target = $region17
  $region16: #{_forward_impl.1} parent=0 // pred_region
    _
  $region17: #{_forward_impl.1} parent=0 // pred_fallthru
    _
  // Predicated region
  $region18: #{_forward_impl.1} parent=0 // pred_check
    _
  $region19: #{_forward_impl.1} parent=0 // pred_check_branch
    %19 = sbr.rel (0) target = $region21
  $region20: #{_forward_impl.1} parent=0 // pred_region
    _
  $region21: #{_forward_impl.1} parent=0 // pred_fallthru
    _
  %v20 = vld [vmem:[%s0] sm:$0xff]
  %v21 = vld [vmem:[%s0 + $0x8] sm:$0x7]
  %v22 = vld [vmem:[%s1] sm:$0xff]
  %v23 = vld [vmem:[%s1 + $0x8] sm:$0xff]
  %v24 = vld [vmem:[%s1 + $0x10] sm:$0xff]
  %v25 = vld [vmem:[%s1 + $0x18] sm:$0xff]
  %v26 = vld [vmem:[%s2] sm:$0xff]
  %v27 = vld [vmem:[%s2 + $0x8] sm:$0xff]
  %v28 = vld [vmem:[%s2 + $0x10] sm:$0xff]
  %v29 = vld [vmem:[%s2 + $0x18] sm:$0xff]
  %31 = vset.pattern.permute.xlu0 0
  %32 = vperm.xlu0 %31, %v26
  %v33 = vpop.permute.xlu0 %32
  %36 = vset.pattern.permute.xlu0 0
  %37 = vperm.xlu0 %36, %v27
  %v38 = vpop.permute.xlu0 %37
  %41 = vset.pattern.permute.xlu0 0
  %42 = vperm.xlu0 %41, %v28
  %v43 = vpop.permute.xlu0 %42
  %46 = vset.pattern.permute.xlu0 0
  %47 = vperm.xlu0 %46, %v29
  %v48 = vpop.permute.xlu0 %47
  %vm50 = vcmask 89088
  %v52 = vsel %vm50, %v22, 0
  %v55 = vsel %vm50, %v23, 0
  %v58 = vsel %vm50, %v24, 0
  %v61 = vsel %vm50, %v25, 0
  %vm63 = vcmask 1042432
  %v65 = vsel %vm63, %v21, 0
  %67 = vmatprep.subr.mxu0 0.0
  %68 = vmatpush1.msra.mxu0 0.0
  %69 = vmatprep.subr.mxu0 0.0
  %70 = vmatpush1.msra.mxu0 0.0
  %71 = vmatprep.subr.mxu0 0.0
  %72 = vmatpush1.msra.mxu0 0.0
  %73 = vmatprep.subr.mxu0 0.0
  %74 = vmatpush1.msra.mxu0 0.0
  %75 = vmatprep.subr.mxu0 0.0
  %76 = vmatpush1.msra.mxu0 0.0
  %77 = vmatprep.subr.mxu0 0.0
  %78 = vmatpush1.msra.mxu0 0.0
  %79 = vmatprep.subr.mxu0 0.0
  %80 = vmatpush1.msra.mxu0 0.0
  %81 = vmatprep.subr.mxu0 0.0
  %82 = vmatpush1.msra.mxu0 0.0
  %83 = vmatprep.subr.mxu0 0.0
  %84 = vmatpush1.msra.mxu0 0.0
  %85 = vmatprep.subr.mxu0 0.0
  %86 = vmatpush1.msra.mxu0 0.0
  %87 = vmatprep.subr.mxu0 0.0
  %88 = vmatpush1.msra.mxu0 0.0
  %89 = vmatprep.subr.mxu0 0.0
  %90 = vmatpush1.msra.mxu0 0.0
  %91 = vmatprep.subr.mxu0 0.0
  %92 = vmatpush1.msra.mxu0 0.0
  %93 = vmatprep.subr.mxu0 0.0
  %94 = vmatpush1.msra.mxu0 0.0
  %95 = vmatprep.subr.mxu0 0.0
  %96 = vmatpush1.msra.mxu0 %v65
  %97 = vmatprep.subr.mxu0 0.0
  %98 = vmatpush1.msra.mxu0 %v20
  %99 = vmatprep.subr.mxu0 0.0
  %100 = vmatpush2.msra.mxu0 0.0
  %101 = vmatprep.subr.mxu0 0.0
  %102 = vmatpush2.msra.mxu0 0.0
  %103 = vmatprep.subr.mxu0 0.0
  %104 = vmatpush2.msra.mxu0 0.0
  %105 = vmatprep.subr.mxu0 0.0
  %106 = vmatpush2.msra.mxu0 0.0
  %107 = vmatprep.subr.mxu0 0.0
  %108 = vmatpush2.msra.mxu0 0.0
  %109 = vmatprep.subr.mxu0 0.0
  %110 = vmatpush2.msra.mxu0 0.0
  %111 = vmatprep.subr.mxu0 0.0
  %112 = vmatpush2.msra.mxu0 0.0
  %113 = vmatprep.subr.mxu0 0.0
  %114 = vmatpush2.msra.mxu0 0.0
  %115 = vmatprep.subr.mxu0 0.0
  %116 = vmatpush2.msra.mxu0 0.0
  %117 = vmatprep.subr.mxu0 0.0
  %118 = vmatpush2.msra.mxu0 0.0
  %119 = vmatprep.subr.mxu0 0.0
  %120 = vmatpush2.msra.mxu0 0.0
  %121 = vmatprep.subr.mxu0 0.0
  %122 = vmatpush2.msra.mxu0 0.0
  %123 = vmatprep.subr.mxu0 0.0
  %124 = vmatpush2.msra.mxu0 0.0
  %125 = vmatprep.subr.mxu0 0.0
  %126 = vmatpush2.msra.mxu0 0.0
  %127 = vmatprep.subr.mxu0 0.0
  %128 = vmatpush2.msra.mxu0 0.0
  %129 = vmatprep.subr.mxu0 0.0
  %130 = vmatpush2.msra.mxu0 0.0
  %131 = vmatprep.mubr.f32.mxu0 0.0
  %132 = vmatmul.mubr.f32.gmra.mxu0 %v52
  %v133 = vpop.f32.mrf.mxu0
  %v134 = vadd.f32 %v33, %v133
  %v135 = vpop.f32.mrf.mxu0
  %136 = vmatprep.mubr.f32.mxu0 0.0
  %137 = vmatmul.mubr.f32.gmra.mxu0 %v55
  %v138 = vpop.f32.mrf.mxu0
  %v139 = vadd.f32 %v38, %v138
  %v140 = vpop.f32.mrf.mxu0
  %141 = vmatprep.mubr.f32.mxu0 0.0
  %142 = vmatmul.mubr.f32.gmra.mxu0 %v58
  %v143 = vpop.f32.mrf.mxu0
  %v144 = vadd.f32 %v43, %v143
  %v145 = vpop.f32.mrf.mxu0
  %146 = vmatprep.mubr.f32.mxu0 0.0
  %147 = vmatmul.mubr.f32.gmra.mxu0 %v61
  %v148 = vpop.f32.mrf.mxu0
  %v149 = vadd.f32 %v48, %v148
  %v150 = vpop.f32.mrf.mxu0
  %151 = vdwg.mxu0
  %v152 = vmax.f32 %v134, 0.0
  %v153 = vmax.f32 %v139, 0.0
  %v154 = vmax.f32 %v144, 0.0
  %v155 = vmax.f32 %v149, 0.0
  %v156 = vld [vmem:[%s3] sm:$0xff]
  %v157 = vld [vmem:[%s4] sm:$0xff]
  %159 = vset.pattern.permute.xlu0 0
  %160 = vperm.xlu0 %159, %v157
  %v161 = vpop.permute.xlu0 %160
  %vm163 = vcmask 261120
  %v165 = vsel %vm163, %v156, 0
  %167 = vmatprep.subr.mxu0 0.0
  %168 = vmatpush1.msra.mxu0 0.0
  %169 = vmatprep.subr.mxu0 0.0
  %170 = vmatpush1.msra.mxu0 0.0
  %171 = vmatprep.subr.mxu0 0.0
  %172 = vmatpush1.msra.mxu0 0.0
  %173 = vmatprep.subr.mxu0 0.0
  %174 = vmatpush1.msra.mxu0 0.0
  %175 = vmatprep.subr.mxu0 0.0
  %176 = vmatpush1.msra.mxu0 0.0
  %177 = vmatprep.subr.mxu0 0.0
  %178 = vmatpush1.msra.mxu0 0.0
  %179 = vmatprep.subr.mxu0 0.0
  %180 = vmatpush1.msra.mxu0 0.0
  %181 = vmatprep.subr.mxu0 0.0
  %182 = vmatpush1.msra.mxu0 0.0
  %183 = vmatprep.subr.mxu0 0.0
  %184 = vmatpush1.msra.mxu0 0.0
  %185 = vmatprep.subr.mxu0 0.0
  %186 = vmatpush1.msra.mxu0 0.0
  %187 = vmatprep.subr.mxu0 0.0
  %188 = vmatpush1.msra.mxu0 0.0
  %189 = vmatprep.subr.mxu0 0.0
  %190 = vmatpush1.msra.mxu0 0.0
  %191 = vmatprep.subr.mxu0 0.0
  %192 = vmatpush1.msra.mxu0 %v155
  %193 = vmatprep.subr.mxu0 0.0
  %194 = vmatpush1.msra.mxu0 %v154
  %195 = vmatprep.subr.mxu0 0.0
  %196 = vmatpush1.msra.mxu0 %v153
  %197 = vmatprep.subr.mxu0 0.0
  %198 = vmatpush1.msra.mxu0 %v152
  %199 = vmatprep.subr.mxu0 0.0
  %200 = vmatpush2.msra.mxu0 0.0
  %201 = vmatprep.subr.mxu0 0.0
  %202 = vmatpush2.msra.mxu0 0.0
  %203 = vmatprep.subr.mxu0 0.0
  %204 = vmatpush2.msra.mxu0 0.0
  %205 = vmatprep.subr.mxu0 0.0
  %206 = vmatpush2.msra.mxu0 0.0
  %207 = vmatprep.subr.mxu0 0.0
  %208 = vmatpush2.msra.mxu0 0.0
  %209 = vmatprep.subr.mxu0 0.0
  %210 = vmatpush2.msra.mxu0 0.0
  %211 = vmatprep.subr.mxu0 0.0
  %212 = vmatpush2.msra.mxu0 0.0
  %213 = vmatprep.subr.mxu0 0.0
  %214 = vmatpush2.msra.mxu0 0.0
  %215 = vmatprep.subr.mxu0 0.0
  %216 = vmatpush2.msra.mxu0 0.0
  %217 = vmatprep.subr.mxu0 0.0
  %218 = vmatpush2.msra.mxu0 0.0
  %219 = vmatprep.subr.mxu0 0.0
  %220 = vmatpush2.msra.mxu0 0.0
  %221 = vmatprep.subr.mxu0 0.0
  %222 = vmatpush2.msra.mxu0 0.0
  %223 = vmatprep.subr.mxu0 0.0
  %224 = vmatpush2.msra.mxu0 0.0
  %225 = vmatprep.subr.mxu0 0.0
  %226 = vmatpush2.msra.mxu0 0.0
  %227 = vmatprep.subr.mxu0 0.0
  %228 = vmatpush2.msra.mxu0 0.0
  %229 = vmatprep.subr.mxu0 0.0
  %230 = vmatpush2.msra.mxu0 0.0
  %231 = vmatprep.mubr.f32.mxu0 0.0
  %232 = vmatmul.mubr.f32.gmra.mxu0 %v165
  %v233 = vpop.f32.mrf.mxu0
  %v234 = vadd.f32 %v161, %v233
  %v235 = vpop.f32.mrf.mxu0
  %236 = vdwg.mxu0
  %237 = vst [vmem:[%s5] sm:$0xff] %v234
  // Predicated region
  $region22: #{_forward_impl.1} parent=0 // pred_check
    _
  $region23: #{_forward_impl.1} parent=0 // pred_check_branch
    %239 = sbr.rel (0) target = $region25
  $region24: #{_forward_impl.1} parent=0 // pred_region
    _
  $region25: #{_forward_impl.1} parent=0 // pred_fallthru
    _
  // Predicated region
  $region26: #{_forward_impl.1} parent=0 // pred_check
    _
  $region27: #{_forward_impl.1} parent=0 // pred_check_branch
    %241 = sbr.rel (0) target = $region29
  $region28: #{_forward_impl.1} parent=0 // pred_region
    _
  $region29: #{_forward_impl.1} parent=0 // pred_fallthru
    _

</llo_original>
